<compile_context>
chip_gen: v6e
topology: v6e:2x2x1
jax: 0.10.0
libtpu: 0.0.40
codegen_flags: <defaults>
</compile_context>

<pallas_src>
import jax
import jax.numpy as jnp
from jax.experimental import pallas as pl
from jax.experimental.pallas import tpu as pltpu


def mlp_kernel(x_ref, hw_ref, slab_ref, o_ref):
    """Fused 5-layer MLP (Linear -> ReLU x4 -> Linear), feature-major layout.

    x_ref:    (1, TILE_N)        input coordinates, batch on the lane axis.
    hw_ref:   (3, H, H)          hidden weights (native nn.Linear (out,in)).
    slab_ref: (H, 8)             col 0: w1, col 1: w5, cols 2-5: b1..b4,
                                 col 6: b5 (broadcast), col 7: unused.
    o_ref:    (1, TILE_N)        output, batch on the lane axis.
    """
    x = x_ref[...]                               # (1, TN)

    # Layer 1 (K = 1): broadcast FMA on the VPU instead of a padded MXU matmul.
    w1 = slab_ref[:, 0:1]                        # (H, 1)
    b1 = slab_ref[:, 2:3]                        # (H, 1)
    h = jnp.maximum(w1 * x + b1, 0.0)            # (H, TN)

    # Layers 2-4: H x H matmuls on the MXU, f32 accumulation.
    h = jnp.maximum(
        jnp.dot(hw_ref[0], h, preferred_element_type=jnp.float32)
        + slab_ref[:, 3:4], 0.0)
    h = jnp.maximum(
        jnp.dot(hw_ref[1], h, preferred_element_type=jnp.float32)
        + slab_ref[:, 4:5], 0.0)
    h = jnp.maximum(
        jnp.dot(hw_ref[2], h, preferred_element_type=jnp.float32)
        + slab_ref[:, 5:6], 0.0)

    # Layer 5 (M = 1): VPU multiply + sublane (XLU) reduce, no MXU round-trip.
    w5 = slab_ref[:, 1:2]                        # (H, 1)
    b5 = slab_ref[0:1, 6:7]                      # (1, 1)
    y = jnp.sum(w5 * h, axis=0, keepdims=True) + b5   # (1, TN)

    o_ref[...] = y.astype(o_ref.dtype)


def pack_params(params):
    """Pack the 10 parameter tensors into 2 VMEM-friendly slabs."""
    (w1, b1), (w2, b2), (w3, b3), (w4, b4), (w5, b5) = params
    hidden = w2.shape[0]

    hidden_w = jnp.stack([w2, w3, w4], axis=0).astype(jnp.float32)  # (3, H, H)

    slab = jnp.zeros((hidden, 8), jnp.float32)
    slab = slab.at[:, 0].set(w1[:, 0])                 # w1 column
    slab = slab.at[:, 1].set(w5[0, :])                 # w5 row -> column
    slab = slab.at[:, 2].set(b1)
    slab = slab.at[:, 3].set(b2)
    slab = slab.at[:, 4].set(b3)
    slab = slab.at[:, 5].set(b4)
    slab = slab.at[:, 6].set(jnp.full((hidden,), b5[0], jnp.float32))
    return hidden_w, slab


def mlpnet_forward(x, params, *, tile_n=512):
    """Run the MLPnet forward pass.

    x: (N, 1) float32; params: list of (W: (out, in), b: (out,)).
    Returns (N, 1), matching PyTorch's nn.Sequential output.
    """
    (w1, _), (w2, _), (_, _), (_, _), (w5, _) = params
    N, in_dim = x.shape
    hidden = w2.shape[0]
    out_dim = w5.shape[0]
    assert in_dim == 1 and out_dim == 1, "wave-regression MLP: scalar in/out"

    hidden_w, slab = pack_params(params)

    # Feature-major, lane-dense batch padded to a multiple of 128 lanes.
    n_pad = ((N + 127) // 128) * 128
    x_t = jnp.transpose(x)                        # (1, N); free for in_dim == 1
    if n_pad != N:
        x_t = jnp.pad(x_t, ((0, 0), (0, n_pad - N)))

    # Lane-axis tile: multiple of 128 that divides n_pad, capped at tile_n.
    tn = min(tile_n, n_pad)
    tn = (tn // 128) * 128
    while n_pad % tn != 0:
        tn -= 128
    grid = (n_pad // tn,)

    flops = 2 * N * (in_dim * hidden + 3 * hidden * hidden + hidden * out_dim)
    bytes_accessed = 4 * int(hidden_w.size + slab.size + x_t.size
                             + n_pad * out_dim)

    y_t = pl.pallas_call(
        mlp_kernel,
        out_shape=jax.ShapeDtypeStruct((out_dim, n_pad), x.dtype),
        grid=grid,
        in_specs=[
            pl.BlockSpec((1, tn), lambda i: (0, i)),                 # x tile
            pl.BlockSpec((3, hidden, hidden), lambda i: (0, 0, 0)),  # weights
            pl.BlockSpec((hidden, 8), lambda i: (0, 0)),             # slab
        ],
        out_specs=pl.BlockSpec((out_dim, tn), lambda i: (0, i)),
        compiler_params=pltpu.CompilerParams(
            dimension_semantics=("parallel",)),
        cost_estimate=pl.CostEstimate(
            flops=flops, transcendentals=0, bytes_accessed=bytes_accessed),
    )(x_t, hidden_w, slab)

    return jnp.transpose(y_t[:, :N])              # (N, 1)


def init_params(key, input_dim, hidden_size, output_dim):
    """Deterministic synthetic parameters in native nn.Linear layout.

    W: (out_features, in_features), b: (out_features,).
    """
    dims = [(input_dim, hidden_size),
            (hidden_size, hidden_size),
            (hidden_size, hidden_size),
            (hidden_size, hidden_size),
            (hidden_size, output_dim)]
    params = []
    for (din, dout) in dims:
        key, kw, kb = jax.random.split(key, 3)
        w = (jax.random.normal(kw, (dout, din), jnp.float32)
             * (1.0 / jnp.sqrt(jnp.float32(din))))
        b = jax.random.normal(kb, (dout,), jnp.float32) * 0.01
        params.append((w, b))
    return params


def mlpnet_reference(x, params):
    """Plain-JAX reference of the same forward pass (row-major, like PyTorch)."""
    (w1, b1), (w2, b2), (w3, b3), (w4, b4), (w5, b5) = params
    h = jnp.maximum(x @ w1.T + b1, 0.0)
    h = jnp.maximum(h @ w2.T + b2, 0.0)
    h = jnp.maximum(h @ w3.T + b3, 0.0)
    h = jnp.maximum(h @ w4.T + b4, 0.0)
    return h @ w5.T + b5


if __name__ == "__main__":
    # The training script feeds x = linspace(0, 1, res) as a column of scalar
    # coordinates -> input_dim = 1, output_dim = 1 (wave regression MLP).
    res = 64
    input_dim = 1
    hidden_size = 32
    output_dim = 1

    key = jax.random.PRNGKey(0)
    params = init_params(key, input_dim, hidden_size, output_dim)

    x = jnp.linspace(0.0, 1.0, res, dtype=jnp.float32).reshape(res, input_dim)

    y = mlpnet_forward(x, params)
    y = jax.block_until_ready(y)

    y_ref = mlpnet_reference(x, params)
    assert y.shape == (res, output_dim)
    assert jnp.allclose(y, y_ref, atol=1e-4, rtol=1e-4), "mismatch vs reference"

    print("KERNEL_OK")
</pallas_src>

<mosaic_0001>
module attributes {stable_mosaic.version = 11 : i64} {
  func.func @mlp_kernel(%arg0: i32, %arg1: memref<1x128xf32, #tpu.memory_space<vmem>>, %arg2: memref<3x32x32xf32, #tpu.memory_space<vmem>>, %arg3: memref<32x8xf32, #tpu.memory_space<vmem>>, %arg4: memref<1x128xf32, #tpu.memory_space<vmem>>) attributes {dimension_semantics = [#tpu.dimension_semantics<parallel>], iteration_bounds = array<i64: 1>, scalar_prefetch = 0 : i64, scratch_operands = 0 : i64, tpu.core_type = #tpu.core_type<tc>, window_params = [{transform_indices = @transform_0, window_bounds = array<i64: 1, 128>}, {pipeline_mode = #tpu.pipeline_mode<synchronous>, transform_indices = @transform_1, window_bounds = array<i64: 3, 32, 32>}, {pipeline_mode = #tpu.pipeline_mode<synchronous>, transform_indices = @transform_2, window_bounds = array<i64: 32, 8>}, {transform_indices = @transform_3, window_bounds = array<i64: 1, 128>}]} {
    %c0 = arith.constant 0 : index
    %c0_0 = arith.constant 0 : index
    %0 = vector.load %arg1[%c0, %c0_0] : memref<1x128xf32, #tpu.memory_space<vmem>>, vector<1x128xf32>
    %c0_1 = arith.constant 0 : index
    %c0_2 = arith.constant 0 : index
    %1 = vector.load %arg3[%c0_1, %c0_2] : memref<32x8xf32, #tpu.memory_space<vmem>>, vector<32x1xf32>
    %c0_3 = arith.constant 0 : index
    %c2 = arith.constant 2 : index
    %2 = vector.load %arg3[%c0_3, %c2] : memref<32x8xf32, #tpu.memory_space<vmem>>, vector<32x1xf32>
    %3 = vector.broadcast %1 : vector<32x1xf32> to vector<32x128xf32>
    %4 = vector.broadcast %0 : vector<1x128xf32> to vector<32x128xf32>
    %5 = arith.mulf %3, %4 : vector<32x128xf32>
    %6 = vector.broadcast %2 : vector<32x1xf32> to vector<32x128xf32>
    %7 = arith.addf %5, %6 : vector<32x128xf32>
    %cst = arith.constant 0.000000e+00 : f32
    %8 = vector.broadcast %cst : f32 to vector<32x128xf32>
    %9 = arith.maximumf %7, %8 : vector<32x128xf32>
    %c0_4 = arith.constant 0 : index
    %c0_5 = arith.constant 0 : index
    %c0_6 = arith.constant 0 : index
    %10 = vector.load %arg2[%c0_4, %c0_5, %c0_6] : memref<3x32x32xf32, #tpu.memory_space<vmem>>, vector<1x32x32xf32>
    %11 = vector.shape_cast %10 : vector<1x32x32xf32> to vector<32x32xf32>
    %cst_7 = arith.constant dense<0.000000e+00> : vector<32x128xf32>
    %12 = tpu.matmul %11, %9, %cst_7 {dimension_numbers = #tpu.dot_dimension_numbers<[1], [0], [0], [1], [0, 0, 1, 1], [], []>} : vector<32x32xf32>, vector<32x128xf32>, vector<32x128xf32> -> vector<32x128xf32>
    %c0_8 = arith.constant 0 : index
    %c3 = arith.constant 3 : index
    %13 = vector.load %arg3[%c0_8, %c3] : memref<32x8xf32, #tpu.memory_space<vmem>>, vector<32x1xf32>
    %14 = vector.broadcast %13 : vector<32x1xf32> to vector<32x128xf32>
    %15 = arith.addf %12, %14 : vector<32x128xf32>
    %cst_9 = arith.constant 0.000000e+00 : f32
    %16 = vector.broadcast %cst_9 : f32 to vector<32x128xf32>
    %17 = arith.maximumf %15, %16 : vector<32x128xf32>
    %c1 = arith.constant 1 : index
    %c0_10 = arith.constant 0 : index
    %c0_11 = arith.constant 0 : index
    %18 = vector.load %arg2[%c1, %c0_10, %c0_11] : memref<3x32x32xf32, #tpu.memory_space<vmem>>, vector<1x32x32xf32>
    %19 = vector.shape_cast %18 : vector<1x32x32xf32> to vector<32x32xf32>
    %cst_12 = arith.constant dense<0.000000e+00> : vector<32x128xf32>
    %20 = tpu.matmul %19, %17, %cst_12 {dimension_numbers = #tpu.dot_dimension_numbers<[1], [0], [0], [1], [0, 0, 1, 1], [], []>} : vector<32x32xf32>, vector<32x128xf32>, vector<32x128xf32> -> vector<32x128xf32>
    %c0_13 = arith.constant 0 : index
    %c4 = arith.constant 4 : index
    %21 = vector.load %arg3[%c0_13, %c4] : memref<32x8xf32, #tpu.memory_space<vmem>>, vector<32x1xf32>
    %22 = vector.broadcast %21 : vector<32x1xf32> to vector<32x128xf32>
    %23 = arith.addf %20, %22 : vector<32x128xf32>
    %cst_14 = arith.constant 0.000000e+00 : f32
    %24 = vector.broadcast %cst_14 : f32 to vector<32x128xf32>
    %25 = arith.maximumf %23, %24 : vector<32x128xf32>
    %c2_15 = arith.constant 2 : index
    %c0_16 = arith.constant 0 : index
    %c0_17 = arith.constant 0 : index
    %26 = vector.load %arg2[%c2_15, %c0_16, %c0_17] : memref<3x32x32xf32, #tpu.memory_space<vmem>>, vector<1x32x32xf32>
    %27 = vector.shape_cast %26 : vector<1x32x32xf32> to vector<32x32xf32>
    %cst_18 = arith.constant dense<0.000000e+00> : vector<32x128xf32>
    %28 = tpu.matmul %27, %25, %cst_18 {dimension_numbers = #tpu.dot_dimension_numbers<[1], [0], [0], [1], [0, 0, 1, 1], [], []>} : vector<32x32xf32>, vector<32x128xf32>, vector<32x128xf32> -> vector<32x128xf32>
    %c0_19 = arith.constant 0 : index
    %c5 = arith.constant 5 : index
    %29 = vector.load %arg3[%c0_19, %c5] : memref<32x8xf32, #tpu.memory_space<vmem>>, vector<32x1xf32>
    %30 = vector.broadcast %29 : vector<32x1xf32> to vector<32x128xf32>
    %31 = arith.addf %28, %30 : vector<32x128xf32>
    %cst_20 = arith.constant 0.000000e+00 : f32
    %32 = vector.broadcast %cst_20 : f32 to vector<32x128xf32>
    %33 = arith.maximumf %31, %32 : vector<32x128xf32>
    %c0_21 = arith.constant 0 : index
    %c1_22 = arith.constant 1 : index
    %34 = vector.load %arg3[%c0_21, %c1_22] : memref<32x8xf32, #tpu.memory_space<vmem>>, vector<32x1xf32>
    %c0_23 = arith.constant 0 : index
    %c6 = arith.constant 6 : index
    %35 = vector.load %arg3[%c0_23, %c6] : memref<32x8xf32, #tpu.memory_space<vmem>>, vector<1x1xf32>
    %36 = vector.broadcast %34 : vector<32x1xf32> to vector<32x128xf32>
    %37 = arith.mulf %36, %33 : vector<32x128xf32>
    %cst_24 = arith.constant dense<0.000000e+00> : vector<128xf32>
    %38 = vector.multi_reduction <add>, %37, %cst_24 [0] : vector<32x128xf32> to vector<128xf32>
    %39 = vector.shape_cast %38 : vector<128xf32> to vector<1x128xf32>
    %40 = vector.broadcast %35 : vector<1x1xf32> to vector<1x128xf32>
    %41 = arith.addf %39, %40 : vector<1x128xf32>
    %c0_25 = arith.constant 0 : index
    %c0_26 = arith.constant 0 : index
    %42 = vector.load %arg4[%c0_25, %c0_26] : memref<1x128xf32, #tpu.memory_space<vmem>>, vector<1x128xf32>
    tpu.vector_store %arg4[%c0_25, %c0_26], %41 {strides = array<i32>} : memref<1x128xf32, #tpu.memory_space<vmem>>, vector<1x128xf32>,
    return
  }
  func.func @transform_0(%arg0: i32) -> (i32, i32) {
    %c0_i32 = arith.constant 0 : i32
    %c0_i32_0 = arith.constant 0 : i32
    return %c0_i32, %arg0 : i32, i32
  }
  func.func @transform_1(%arg0: i32) -> (i32, i32, i32) {
    %c0_i32 = arith.constant 0 : i32
    %c0_i32_0 = arith.constant 0 : i32
    %c0_i32_1 = arith.constant 0 : i32
    %c0_i32_2 = arith.constant 0 : i32
    return %c0_i32, %c0_i32_0, %c0_i32_1 : i32, i32, i32
  }
  func.func @transform_2(%arg0: i32) -> (i32, i32) {
    %c0_i32 = arith.constant 0 : i32
    %c0_i32_0 = arith.constant 0 : i32
    %c0_i32_1 = arith.constant 0 : i32
    return %c0_i32, %c0_i32_0 : i32, i32
  }
  func.func @transform_3(%arg0: i32) -> (i32, i32) {
    %c0_i32 = arith.constant 0 : i32
    %c0_i32_0 = arith.constant 0 : i32
    return %c0_i32, %arg0 : i32, i32
  }
}

</mosaic_0001>

<llo_original>
// kernel: tpu_custom_call.1
$region0: #{tpu_custom_call.1}
  #allocation0 [shape = 'u32[]', space=smem, size = 0x4, offset = 0x4, fixed_abs, tag = 'smem constant byte address 0x4 - core index']
  #allocation1 [shape = 'u32[144,128]{1,0:T(1,128)}', space=vmem, size = 0x12000, scoped, tag = 'internal scratch']
  %s0 = inlined_call_operand.vmem [shape: f32[1,128], index: 0, kind: input, shape index: {}]
  %s1 = inlined_call_operand.hbm [shape: f32[3,32,32], index: 1, kind: input, shape index: {}]
  %s2 = inlined_call_operand.vmem [shape: f32[32,8], index: 2, kind: input, shape index: {}]
  %s3 = inlined_call_operand.hbm [shape: f32[1,128], index: 3, kind: output, shape index: {}]
  %s4 = sld [smem:[#allocation0]]
  $region26: #{tpu_custom_call.1} parent=0
    _
  %s6 = ssub.s32 1, %s4
  %s7 = scalar_select 0, %s6, %s4
  $region1: #{tpu_custom_call.1} parent=0
    #allocation2 [shape = 'u8[49152]{0}', space=vmem, size = 0xc000, scoped, tag = 'input window, operand 1, single buffered']
    #allocation3 [shape = 's32[1]{0}', space=sflag, size = 0x4, scoped, tag = 'scoped memory for tpu_custom_call.1']
    #allocation4 [shape = 's32[1]{0}', space=sflag, size = 0x4, scoped, tag = 'scoped memory for tpu_custom_call.1']
    #allocation5 [shape = 'u8[512]{0}', space=vmem, size = 0x400, scoped, tag = 'output window, operand 0, single buffered']
    %8 = vsyncpa [#allocation3], 0
    %9 = vsyncpa [#allocation4], 0
    // Predicated region
    $region2: #{tpu_custom_call.1} parent=1 // pred_check
      _
    $region3: #{tpu_custom_call.1} parent=1 // pred_check_branch
      %11 = sbr.rel (0) target = $region5
    $region4: #{tpu_custom_call.1} parent=1 // pred_region
      _
    $region5: #{tpu_custom_call.1} parent=1 // pred_fallthru
      _
    // Predicated region
    $region6: #{tpu_custom_call.1} parent=1 // pred_check
      _
    $region7: #{tpu_custom_call.1} parent=1 // pred_check_branch
      %13 = sbr.rel (0) target = $region9
    $region8: #{tpu_custom_call.1} parent=1 // pred_region
      %s15 = ssub.s32 1536, 1536
      %16 = vsyncadd [#allocation3], %s15
      %s17 = sshll.u32 [#allocation2], 4
      %s18 = int_to_ptr.vmem [resolvable:$true] %s17
      %23 = dma.hbm_to_vmem [thread:$0]  %s1, 1536, %s18, [#allocation3], 128, 128, 8
    $region9: #{tpu_custom_call.1} parent=1 // pred_fallthru
      _
    // Predicated region
    $region10: #{tpu_custom_call.1} parent=1 // pred_check
      _
    $region11: #{tpu_custom_call.1} parent=1 // pred_check_branch
      %25 = sbr.rel (0) target = $region13
    $region12: #{tpu_custom_call.1} parent=1 // pred_region
      _
    $region13: #{tpu_custom_call.1} parent=1 // pred_fallthru
      _
    // Predicated region
    $region14: #{tpu_custom_call.1} parent=1 // pred_check
      _
    $region15: #{tpu_custom_call.1} parent=1 // pred_check_branch
      %27 = sbr.rel (0) target = $region17
    $region16: #{tpu_custom_call.1} parent=1 // pred_region
      %28 = dma.done [#allocation3], 1536
    $region17: #{tpu_custom_call.1} parent=1 // pred_fallthru
      _
    %v29 = vld [vmem:[%s0] sm:$0x1]
    %v30 = vld [vmem:[%s2] sm:$0xff]
    %v31 = vld [vmem:[%s2 + $0x8] sm:$0xff]
    %v32 = vld [vmem:[%s2 + $0x10] sm:$0xff]
    %v33 = vld [vmem:[%s2 + $0x18] sm:$0xff]
    %35 = vset.pattern.permute.xlu0 0
    %36 = vperm.xlu0 %35, %v30
    %v37 = vpop.permute.xlu0 %36
    %40 = vset.pattern.permute.xlu0 0
    %41 = vperm.xlu0 %40, %v31
    %v42 = vpop.permute.xlu0 %41
    %45 = vset.pattern.permute.xlu0 0
    %46 = vperm.xlu0 %45, %v32
    %v47 = vpop.permute.xlu0 %46
    %50 = vset.pattern.permute.xlu0 0
    %51 = vperm.xlu0 %50, %v33
    %v52 = vpop.permute.xlu0 %51
    %v55 = vlaneseq
    %v56 = vshrl.u32 %v55, 7
    %v57 = vsub.s32 0, %v56
    %v58 = vrot.slane %v29, %v57
    %v60 = vmul.f32 %v37, %v58
    %v61 = vmul.f32 %v42, %v58
    %v62 = vmul.f32 %v47, %v58
    %v63 = vmul.f32 %v52, %v58
    %64 = vset.pattern.permute.xlu0 2
    %65 = vperm.xlu0 %64, %v30
    %v66 = vpop.permute.xlu0 %65
    %68 = vset.pattern.permute.xlu0 2
    %69 = vperm.xlu0 %68, %v31
    %v70 = vpop.permute.xlu0 %69
    %72 = vset.pattern.permute.xlu0 2
    %73 = vperm.xlu0 %72, %v32
    %v74 = vpop.permute.xlu0 %73
    %76 = vset.pattern.permute.xlu0 2
    %77 = vperm.xlu0 %76, %v33
    %v78 = vpop.permute.xlu0 %77
    %v80 = vadd.f32 %v60, %v66
    %v81 = vadd.f32 %v61, %v70
    %v82 = vadd.f32 %v62, %v74
    %v83 = vadd.f32 %v63, %v78
    %v84 = vmax.f32 %v80, 0.0
    %v85 = vmax.f32 %v81, 0.0
    %v86 = vmax.f32 %v82, 0.0
    %v87 = vmax.f32 %v83, 0.0
    %v88 = vld [vmem:[#allocation2] sm:$0xff]
    %v89 = vld [vmem:[#allocation2 + $0x8] sm:$0xff]
    %v90 = vld [vmem:[#allocation2 + $0x10] sm:$0xff]
    %v91 = vld [vmem:[#allocation2 + $0x18] sm:$0xff]
    %92 = vset.pattern.permute.xlu0 3
    %93 = vperm.xlu0 %92, %v30
    %v94 = vpop.permute.xlu0 %93
    %96 = vset.pattern.permute.xlu0 3
    %97 = vperm.xlu0 %96, %v31
    %v98 = vpop.permute.xlu0 %97
    %100 = vset.pattern.permute.xlu0 3
    %101 = vperm.xlu0 %100, %v32
    %v102 = vpop.permute.xlu0 %101
    %104 = vset.pattern.permute.xlu0 3
    %105 = vperm.xlu0 %104, %v33
    %v106 = vpop.permute.xlu0 %105
    %vm108 = vcmask 261120
    %v110 = vsel %vm108, %v88, 0
    %v113 = vsel %vm108, %v89, 0
    %v116 = vsel %vm108, %v90, 0
    %v119 = vsel %vm108, %v91, 0
    %121 = vmatprep.subr.mxu0 0.0
    %122 = vmatpush1.msra.mxu0 0.0
    %123 = vmatprep.subr.mxu0 0.0
    %124 = vmatpush1.msra.mxu0 0.0
    %125 = vmatprep.subr.mxu0 0.0
    %126 = vmatpush1.msra.mxu0 0.0
    %127 = vmatprep.subr.mxu0 0.0
    %128 = vmatpush1.msra.mxu0 0.0
    %129 = vmatprep.subr.mxu0 0.0
    %130 = vmatpush1.msra.mxu0 0.0
    %131 = vmatprep.subr.mxu0 0.0
    %132 = vmatpush1.msra.mxu0 0.0
    %133 = vmatprep.subr.mxu0 0.0
    %134 = vmatpush1.msra.mxu0 0.0
    %135 = vmatprep.subr.mxu0 0.0
    %136 = vmatpush1.msra.mxu0 0.0
    %137 = vmatprep.subr.mxu0 0.0
    %138 = vmatpush1.msra.mxu0 0.0
    %139 = vmatprep.subr.mxu0 0.0
    %140 = vmatpush1.msra.mxu0 0.0
    %141 = vmatprep.subr.mxu0 0.0
    %142 = vmatpush1.msra.mxu0 0.0
    %143 = vmatprep.subr.mxu0 0.0
    %144 = vmatpush1.msra.mxu0 0.0
    %145 = vmatprep.subr.mxu0 0.0
    %146 = vmatpush1.msra.mxu0 %v87
    %147 = vmatprep.subr.mxu0 0.0
    %148 = vmatpush1.msra.mxu0 %v86
    %149 = vmatprep.subr.mxu0 0.0
    %150 = vmatpush1.msra.mxu0 %v85
    %151 = vmatprep.subr.mxu0 0.0
    %152 = vmatpush1.msra.mxu0 %v84
    %153 = vmatprep.subr.mxu0 0.0
    %154 = vmatpush2.msra.mxu0 0.0
    %155 = vmatprep.subr.mxu0 0.0
    %156 = vmatpush2.msra.mxu0 0.0
    %157 = vmatprep.subr.mxu0 0.0
    %158 = vmatpush2.msra.mxu0 0.0
    %159 = vmatprep.subr.mxu0 0.0
    %160 = vmatpush2.msra.mxu0 0.0
    %161 = vmatprep.subr.mxu0 0.0
    %162 = vmatpush2.msra.mxu0 0.0
    %163 = vmatprep.subr.mxu0 0.0
    %164 = vmatpush2.msra.mxu0 0.0
    %165 = vmatprep.subr.mxu0 0.0
    %166 = vmatpush2.msra.mxu0 0.0
    %167 = vmatprep.subr.mxu0 0.0
    %168 = vmatpush2.msra.mxu0 0.0
    %169 = vmatprep.subr.mxu0 0.0
    %170 = vmatpush2.msra.mxu0 0.0
    %171 = vmatprep.subr.mxu0 0.0
    %172 = vmatpush2.msra.mxu0 0.0
    %173 = vmatprep.subr.mxu0 0.0
    %174 = vmatpush2.msra.mxu0 0.0
    %175 = vmatprep.subr.mxu0 0.0
    %176 = vmatpush2.msra.mxu0 0.0
    %177 = vmatprep.subr.mxu0 0.0
    %178 = vmatpush2.msra.mxu0 0.0
    %179 = vmatprep.subr.mxu0 0.0
    %180 = vmatpush2.msra.mxu0 0.0
    %181 = vmatprep.subr.mxu0 0.0
    %182 = vmatpush2.msra.mxu0 0.0
    %183 = vmatprep.subr.mxu0 0.0
    %184 = vmatpush2.msra.mxu0 0.0
    %185 = vmatprep.mubr.f32.mxu0 0.0
    %186 = vmatmul.mubr.f32.gmra.mxu0 %v110
    %v187 = vpop.f32.mrf.mxu0
    %v188 = vadd.f32 %v94, %v187
    %v189 = vpop.f32.mrf.mxu0
    %190 = vmatprep.mubr.f32.mxu0 0.0
    %191 = vmatmul.mubr.f32.gmra.mxu0 %v113
    %v192 = vpop.f32.mrf.mxu0
    %v193 = vadd.f32 %v98, %v192
    %v194 = vpop.f32.mrf.mxu0
    %195 = vmatprep.mubr.f32.mxu0 0.0
    %196 = vmatmul.mubr.f32.gmra.mxu0 %v116
    %v197 = vpop.f32.mrf.mxu0
    %v198 = vadd.f32 %v102, %v197
    %v199 = vpop.f32.mrf.mxu0
    %200 = vmatprep.mubr.f32.mxu0 0.0
    %201 = vmatmul.mubr.f32.gmra.mxu0 %v119
    %v202 = vpop.f32.mrf.mxu0
    %v203 = vadd.f32 %v106, %v202
    %v204 = vpop.f32.mrf.mxu0
    %205 = vdwg.mxu0
    %v206 = vmax.f32 %v188, 0.0
    %v207 = vmax.f32 %v193, 0.0
    %v208 = vmax.f32 %v198, 0.0
    %v209 = vmax.f32 %v203, 0.0
    %s210 = scalar_lea.vmem [#allocation2], 32
    %v211 = vld [vmem:[%s210] sm:$0xff]
    %v212 = vld [vmem:[%s210 + $0x8] sm:$0xff]
    %v213 = vld [vmem:[%s210 + $0x10] sm:$0xff]
    %v214 = vld [vmem:[%s210 + $0x18] sm:$0xff]
    %215 = vset.pattern.permute.xlu0 4
    %216 = vperm.xlu0 %215, %v30
    %v217 = vpop.permute.xlu0 %216
    %219 = vset.pattern.permute.xlu0 4
    %220 = vperm.xlu0 %219, %v31
    %v221 = vpop.permute.xlu0 %220
    %223 = vset.pattern.permute.xlu0 4
    %224 = vperm.xlu0 %223, %v32
    %v225 = vpop.permute.xlu0 %224
    %227 = vset.pattern.permute.xlu0 4
    %228 = vperm.xlu0 %227, %v33
    %v229 = vpop.permute.xlu0 %228
    %v232 = vsel %vm108, %v211, 0
    %v235 = vsel %vm108, %v212, 0
    %v238 = vsel %vm108, %v213, 0
    %v241 = vsel %vm108, %v214, 0
    %243 = vmatprep.subr.mxu0 0.0
    %244 = vmatpush1.msra.mxu0 0.0
    %245 = vmatprep.subr.mxu0 0.0
    %246 = vmatpush1.msra.mxu0 0.0
    %247 = vmatprep.subr.mxu0 0.0
    %248 = vmatpush1.msra.mxu0 0.0
    %249 = vmatprep.subr.mxu0 0.0
    %250 = vmatpush1.msra.mxu0 0.0
    %251 = vmatprep.subr.mxu0 0.0
    %252 = vmatpush1.msra.mxu0 0.0
    %253 = vmatprep.subr.mxu0 0.0
    %254 = vmatpush1.msra.mxu0 0.0
    %255 = vmatprep.subr.mxu0 0.0
    %256 = vmatpush1.msra.mxu0 0.0
    %257 = vmatprep.subr.mxu0 0.0
    %258 = vmatpush1.msra.mxu0 0.0
    %259 = vmatprep.subr.mxu0 0.0
    %260 = vmatpush1.msra.mxu0 0.0
    %261 = vmatprep.subr.mxu0 0.0
    %262 = vmatpush1.msra.mxu0 0.0
    %263 = vmatprep.subr.mxu0 0.0
    %264 = vmatpush1.msra.mxu0 0.0
    %265 = vmatprep.subr.mxu0 0.0
    %266 = vmatpush1.msra.mxu0 0.0
    %267 = vmatprep.subr.mxu0 0.0
    %268 = vmatpush1.msra.mxu0 %v209
    %269 = vmatprep.subr.mxu0 0.0
    %270 = vmatpush1.msra.mxu0 %v208
    %271 = vmatprep.subr.mxu0 0.0
    %272 = vmatpush1.msra.mxu0 %v207
    %273 = vmatprep.subr.mxu0 0.0
    %274 = vmatpush1.msra.mxu0 %v206
    %275 = vmatprep.subr.mxu0 0.0
    %276 = vmatpush2.msra.mxu0 0.0
    %277 = vmatprep.subr.mxu0 0.0
    %278 = vmatpush2.msra.mxu0 0.0
    %279 = vmatprep.subr.mxu0 0.0
    %280 = vmatpush2.msra.mxu0 0.0
    %281 = vmatprep.subr.mxu0 0.0
    %282 = vmatpush2.msra.mxu0 0.0
    %283 = vmatprep.subr.mxu0 0.0
    %284 = vmatpush2.msra.mxu0 0.0
    %285 = vmatprep.subr.mxu0 0.0
    %286 = vmatpush2.msra.mxu0 0.0
    %287 = vmatprep.subr.mxu0 0.0
    %288 = vmatpush2.msra.mxu0 0.0
    %289 = vmatprep.subr.mxu0 0.0
    %290 = vmatpush2.msra.mxu0 0.0
    %291 = vmatprep.subr.mxu0 0.0
    %292 = vmatpush2.msra.mxu0 0.0
    %293 = vmatprep.subr.mxu0 0.0
    %294 = vmatpush2.msra.mxu0 0.0
    %295 = vmatprep.subr.mxu0 0.0
    %296 = vmatpush2.msra.mxu0 0.0
    %297 = vmatprep.subr.mxu0 0.0
    %298 = vmatpush2.msra.mxu0 0.0
    %299 = vmatprep.subr.mxu0 0.0
    %300 = vmatpush2.msra.mxu0 0.0
    %301 = vmatprep.subr.mxu0 0.0
    %302 = vmatpush2.msra.mxu0 0.0
    %303 = vmatprep.subr.mxu0 0.0
    %304 = vmatpush2.msra.mxu0 0.0
    %305 = vmatprep.subr.mxu0 0.0
    %306 = vmatpush2.msra.mxu0 0.0
    %307 = vmatprep.mubr.f32.mxu0 0.0
    %308 = vmatmul.mubr.f32.gmra.mxu0 %v232
    %v309 = vpop.f32.mrf.mxu0
    %v310 = vadd.f32 %v217, %v309
    %v311 = vpop.f32.mrf.mxu0
    %312 = vmatprep.mubr.f32.mxu0 0.0
    %313 = vmatmul.mubr.f32.gmra.mxu0 %v235
    %v314 = vpop.f32.mrf.mxu0
    %v315 = vadd.f32 %v221, %v314
    %v316 = vpop.f32.mrf.mxu0
    %317 = vmatprep.mubr.f32.mxu0 0.0
    %318 = vmatmul.mubr.f32.gmra.mxu0 %v238
    %v319 = vpop.f32.mrf.mxu0
    %v320 = vadd.f32 %v225, %v319
    %v321 = vpop.f32.mrf.mxu0
    %322 = vmatprep.mubr.f32.mxu0 0.0
    %323 = vmatmul.mubr.f32.gmra.mxu0 %v241
    %v324 = vpop.f32.mrf.mxu0
    %v325 = vadd.f32 %v229, %v324
    %v326 = vpop.f32.mrf.mxu0
    %327 = vdwg.mxu0
    %v328 = vmax.f32 %v310, 0.0
    %v329 = vmax.f32 %v315, 0.0
    %v330 = vmax.f32 %v320, 0.0
    %v331 = vmax.f32 %v325, 0.0
    %s332 = scalar_lea.vmem [#allocation2], 64
    %v333 = vld [vmem:[%s332] sm:$0xff]
    %v334 = vld [vmem:[%s332 + $0x8] sm:$0xff]
    %v335 = vld [vmem:[%s332 + $0x10] sm:$0xff]
    %v336 = vld [vmem:[%s332 + $0x18] sm:$0xff]
    %337 = vset.pattern.permute.xlu0 5
    %338 = vperm.xlu0 %337, %v30
    %v339 = vpop.permute.xlu0 %338
    %341 = vset.pattern.permute.xlu0 5
    %342 = vperm.xlu0 %341, %v31
    %v343 = vpop.permute.xlu0 %342
    %345 = vset.pattern.permute.xlu0 5
    %346 = vperm.xlu0 %345, %v32
    %v347 = vpop.permute.xlu0 %346
    %349 = vset.pattern.permute.xlu0 5
    %350 = vperm.xlu0 %349, %v33
    %v351 = vpop.permute.xlu0 %350
    %v354 = vsel %vm108, %v333, 0
    %v357 = vsel %vm108, %v334, 0
    %v360 = vsel %vm108, %v335, 0
    %v363 = vsel %vm108, %v336, 0
    %365 = vmatprep.subr.mxu0 0.0
    %366 = vmatpush1.msra.mxu0 0.0
    %367 = vmatprep.subr.mxu0 0.0
    %368 = vmatpush1.msra.mxu0 0.0
    %369 = vmatprep.subr.mxu0 0.0
    %370 = vmatpush1.msra.mxu0 0.0
    %371 = vmatprep.subr.mxu0 0.0
    %372 = vmatpush1.msra.mxu0 0.0
    %373 = vmatprep.subr.mxu0 0.0
    %374 = vmatpush1.msra.mxu0 0.0
    %375 = vmatprep.subr.mxu0 0.0
    %376 = vmatpush1.msra.mxu0 0.0
    %377 = vmatprep.subr.mxu0 0.0
    %378 = vmatpush1.msra.mxu0 0.0
    %379 = vmatprep.subr.mxu0 0.0
    %380 = vmatpush1.msra.mxu0 0.0
    %381 = vmatprep.subr.mxu0 0.0
    %382 = vmatpush1.msra.mxu0 0.0
    %383 = vmatprep.subr.mxu0 0.0
    %384 = vmatpush1.msra.mxu0 0.0
    %385 = vmatprep.subr.mxu0 0.0
    %386 = vmatpush1.msra.mxu0 0.0
    %387 = vmatprep.subr.mxu0 0.0
    %388 = vmatpush1.msra.mxu0 0.0
    %389 = vmatprep.subr.mxu0 0.0
    %390 = vmatpush1.msra.mxu0 %v331
    %391 = vmatprep.subr.mxu0 0.0
    %392 = vmatpush1.msra.mxu0 %v330
    %393 = vmatprep.subr.mxu0 0.0
    %394 = vmatpush1.msra.mxu0 %v329
    %395 = vmatprep.subr.mxu0 0.0
    %396 = vmatpush1.msra.mxu0 %v328
    %397 = vmatprep.subr.mxu0 0.0
    %398 = vmatpush2.msra.mxu0 0.0
    %399 = vmatprep.subr.mxu0 0.0
    %400 = vmatpush2.msra.mxu0 0.0
    %401 = vmatprep.subr.mxu0 0.0
    %402 = vmatpush2.msra.mxu0 0.0
    %403 = vmatprep.subr.mxu0 0.0
    %404 = vmatpush2.msra.mxu0 0.0
    %405 = vmatprep.subr.mxu0 0.0
    %406 = vmatpush2.msra.mxu0 0.0
    %407 = vmatprep.subr.mxu0 0.0
    %408 = vmatpush2.msra.mxu0 0.0
    %409 = vmatprep.subr.mxu0 0.0
    %410 = vmatpush2.msra.mxu0 0.0
    %411 = vmatprep.subr.mxu0 0.0
    %412 = vmatpush2.msra.mxu0 0.0
    %413 = vmatprep.subr.mxu0 0.0
    %414 = vmatpush2.msra.mxu0 0.0
    %415 = vmatprep.subr.mxu0 0.0
    %416 = vmatpush2.msra.mxu0 0.0
    %417 = vmatprep.subr.mxu0 0.0
    %418 = vmatpush2.msra.mxu0 0.0
    %419 = vmatprep.subr.mxu0 0.0
    %420 = vmatpush2.msra.mxu0 0.0
    %421 = vmatprep.subr.mxu0 0.0
    %422 = vmatpush2.msra.mxu0 0.0
    %423 = vmatprep.subr.mxu0 0.0
    %424 = vmatpush2.msra.mxu0 0.0
    %425 = vmatprep.subr.mxu0 0.0
    %426 = vmatpush2.msra.mxu0 0.0
    %427 = vmatprep.subr.mxu0 0.0
    %428 = vmatpush2.msra.mxu0 0.0
    %429 = vmatprep.mubr.f32.mxu0 0.0
    %430 = vmatmul.mubr.f32.gmra.mxu0 %v354
    %v431 = vpop.f32.mrf.mxu0
    %v432 = vadd.f32 %v339, %v431
    %v433 = vpop.f32.mrf.mxu0
    %434 = vmatprep.mubr.f32.mxu0 0.0
    %435 = vmatmul.mubr.f32.gmra.mxu0 %v357
    %v436 = vpop.f32.mrf.mxu0
    %v437 = vadd.f32 %v343, %v436
    %v438 = vpop.f32.mrf.mxu0
    %439 = vmatprep.mubr.f32.mxu0 0.0
    %440 = vmatmul.mubr.f32.gmra.mxu0 %v360
    %v441 = vpop.f32.mrf.mxu0
    %v442 = vadd.f32 %v347, %v441
    %v443 = vpop.f32.mrf.mxu0
    %444 = vmatprep.mubr.f32.mxu0 0.0
    %445 = vmatmul.mubr.f32.gmra.mxu0 %v363
    %v446 = vpop.f32.mrf.mxu0
    %v447 = vadd.f32 %v351, %v446
    %v448 = vpop.f32.mrf.mxu0
    %449 = vdwg.mxu0
    %v450 = vmax.f32 %v432, 0.0
    %v451 = vmax.f32 %v437, 0.0
    %v452 = vmax.f32 %v442, 0.0
    %v453 = vmax.f32 %v447, 0.0
    %v454 = vld [vmem:[%s2] sm:$0x1]
    %455 = vset.pattern.permute.xlu0 1
    %456 = vperm.xlu0 %455, %v30
    %v457 = vpop.permute.xlu0 %456
    %459 = vset.pattern.permute.xlu0 1
    %460 = vperm.xlu0 %459, %v31
    %v461 = vpop.permute.xlu0 %460
    %463 = vset.pattern.permute.xlu0 1
    %464 = vperm.xlu0 %463, %v32
    %v465 = vpop.permute.xlu0 %464
    %467 = vset.pattern.permute.xlu0 1
    %468 = vperm.xlu0 %467, %v33
    %v469 = vpop.permute.xlu0 %468
    %v471 = vmul.f32 %v457, %v450
    %v472 = vmul.f32 %v461, %v451
    %v473 = vmul.f32 %v465, %v452
    %v474 = vmul.f32 %v469, %v453
    %v475 = vadd.f32 %v471, %v472
    %v476 = vadd.f32 %v475, %v473
    %v477 = vadd.f32 %v476, %v474
    %v478 = vrot.slane %v477, 4
    %v479 = vadd.f32 %v477, %v478
    %v480 = vrot.slane %v479, 2
    %v481 = vadd.f32 %v479, %v480
    %v482 = vrot.slane %v481, 1
    %v483 = vadd.f32 %v481, %v482
    %485 = vset.pattern.permute.xlu0 6
    %486 = vperm.xlu0 %485, %v454
    %v487 = vpop.permute.xlu0 %486
    %v489 = vadd.f32 %v483, %v487
    %490 = vst [vmem:[#allocation5] sm:$0x1] %v489
    // Predicated region
    $region18: #{tpu_custom_call.1} parent=1 // pred_check
      _
    $region19: #{tpu_custom_call.1} parent=1 // pred_check_branch
      %492 = sbr.rel (0) target = $region21
    $region20: #{tpu_custom_call.1} parent=1 // pred_region
      %s494 = ssub.s32 16, 16
      %495 = vsyncadd [#allocation4], %s494
      %s497 = sshll.u32 [#allocation5], 4
      %s498 = int_to_ptr.vmem [resolvable:$true] %s497
      %500 = dma.vmem_to_hbm [thread:$0]  %s498, 16, %s3, [#allocation4]
    $region21: #{tpu_custom_call.1} parent=1 // pred_fallthru
      _
    // Predicated region
    $region22: #{tpu_custom_call.1} parent=1 // pred_check
      _
    $region23: #{tpu_custom_call.1} parent=1 // pred_check_branch
      %502 = sbr.rel (0) target = $region25
    $region24: #{tpu_custom_call.1} parent=1 // pred_region
      %503 = dma.done [#allocation4], 16
    $region25: #{tpu_custom_call.1} parent=1 // pred_fallthru
      _
    %504 = vsyncpa [#allocation3], 1
    %505 = vsyncpa [#allocation4], 1

</llo_original>
